<compile_context>
chip_gen: v5e
topology: v5e:2x2
jax: 0.10.0
libtpu: 0.0.40
codegen_flags: <defaults>
</compile_context>

<pallas_src>
from itertools import product

import numpy as np
import jax
import jax.numpy as jnp
from jax.experimental import pallas as pl
from jax.experimental.pallas import tpu as pltpu

BN_EPS = 1e-3
TN = 256  # point-axis tile (sublane-aligned, bucketed so shapes repeat across calls)


# ----------------------------------------------------------------------------
# Pallas kernel: tiled matmul with fused BN affine / residual / ReLU epilogue
# ----------------------------------------------------------------------------
def _make_spconv_kernel(relu, has_res):
    def body(a_ref, b_ref, sc_ref, sh_ref, r_ref, o_ref, acc_ref):
        k = pl.program_id(1)

        @pl.when(k == 0)
        def _():
            acc_ref[...] = jnp.zeros_like(acc_ref)

        acc_ref[...] += jnp.dot(a_ref[...], b_ref[...],
                                preferred_element_type=jnp.float32)

        @pl.when(k == pl.num_programs(1) - 1)
        def _():
            y = acc_ref[...] * sc_ref[...] + sh_ref[...]
            if has_res:
                y = y + r_ref[...]
            if relu:
                y = jnp.maximum(y, 0.0)
            o_ref[...] = y.astype(o_ref.dtype)

    if has_res:
        def kernel(a_ref, b_ref, sc_ref, sh_ref, r_ref, o_ref, acc_ref):
            body(a_ref, b_ref, sc_ref, sh_ref, r_ref, o_ref, acc_ref)
    else:
        def kernel(a_ref, b_ref, sc_ref, sh_ref, o_ref, acc_ref):
            body(a_ref, b_ref, sc_ref, sh_ref, None, o_ref, acc_ref)
    return kernel


def _round_up(x, m):
    return ((x + m - 1) // m) * m


def spconv(feat, idx, weight, scale, shift, relu, residual=None):
    """Sparse conv with fused BN/residual/ReLU.

    feat:   [N_in, Cin] f32 features.
    idx:    [K, N_out] int rulebook (-1 = missing), or None for a 1x1 identity
            rulebook (K must be 1).
    weight: [K, Cin, Cout];  scale/shift: [Cout];  residual: [N_out, Cout] or None.
    Returns [N_out, Cout] f32.
    """
    K, Cin, Cout = weight.shape

    # ---- rulebook gather folded into the contraction: [N_out, K*Cin] (bf16) ----
    if idx is None:
        assert K == 1 and feat.shape[1] == Cin
        Nout = feat.shape[0]
        g = feat.astype(jnp.bfloat16)
    else:
        Nout = idx.shape[1]
        idx_nk = jnp.asarray(np.ascontiguousarray(idx.T), jnp.int32)     # [N_out, K]
        feat_ext = jnp.concatenate(
            [feat.astype(jnp.bfloat16),
             jnp.zeros((1, feat.shape[1]), jnp.bfloat16)], axis=0)       # zero row
        safe = jnp.where(idx_nk >= 0, idx_nk, feat.shape[0])             # -1 -> zero row
        g = jnp.take(feat_ext, safe, axis=0).reshape(Nout, K * Cin)

    Kc = K * Cin
    # tile sizes: lane-dense Cout, reduction tile multiple of 128
    Coutp = _round_up(Cout, 128)
    if Kc <= 512:
        Kcp = _round_up(Kc, 128)
        TK = Kcp
    else:
        TK = 512
        Kcp = _round_up(Kc, TK)
    Np = _round_up(max(Nout, 1), TN)

    g = jnp.pad(g, ((0, Np - Nout), (0, Kcp - Kc)))
    w = jnp.pad(weight.reshape(Kc, Cout).astype(jnp.bfloat16),
                ((0, Kcp - Kc), (0, Coutp - Cout)))
    sc = jnp.pad(scale.astype(jnp.float32), (0, Coutp - Cout)).reshape(1, Coutp)
    sh = jnp.pad(shift.astype(jnp.float32), (0, Coutp - Cout)).reshape(1, Coutp)

    has_res = residual is not None
    inputs = [g, w, sc, sh]
    in_specs = [
        pl.BlockSpec((TN, TK), lambda i, k: (i, k)),
        pl.BlockSpec((TK, Coutp), lambda i, k: (k, 0)),
        pl.BlockSpec((1, Coutp), lambda i, k: (0, 0)),
        pl.BlockSpec((1, Coutp), lambda i, k: (0, 0)),
    ]
    if has_res:
        r = jnp.pad(residual.astype(jnp.float32),
                    ((0, Np - Nout), (0, Coutp - Cout)))
        inputs.append(r)
        in_specs.append(pl.BlockSpec((TN, Coutp), lambda i, k: (i, 0)))

    out = pl.pallas_call(
        _make_spconv_kernel(relu, has_res),
        out_shape=jax.ShapeDtypeStruct((Np, Coutp), jnp.float32),
        grid_spec=pltpu.PrefetchScalarGridSpec(
            num_scalar_prefetch=0,
            grid=(Np // TN, Kcp // TK),
            in_specs=in_specs,
            out_specs=pl.BlockSpec((TN, Coutp), lambda i, k: (i, 0)),
            scratch_shapes=[pltpu.VMEM((TN, Coutp), jnp.float32)],
        ),
        compiler_params=pltpu.CompilerParams(
            dimension_semantics=("parallel", "arbitrary")),
    )(*inputs)
    return out[:Nout, :Cout]


# ----------------------------------------------------------------------------
# Host-side rulebook (coordinate hash-table) construction — glue
# ----------------------------------------------------------------------------
def offset2batch(offset):
    batch = np.zeros(int(offset[-1]), dtype=np.int64)
    prev = 0
    for b, o in enumerate(offset):
        batch[prev:int(o)] = b
        prev = int(o)
    return batch


def _coord_dict(coords, batch):
    return {(int(b), int(c[0]), int(c[1]), int(c[2])): i
            for i, (b, c) in enumerate(zip(batch, coords))}


def subm_neighbor_map(coords, batch, ksize):
    """SubMConv3d rulebook: idx[k, i] = input index at coords[i] + offset_k, else -1."""
    r = ksize // 2
    offs = list(product(range(-r, r + 1), repeat=3))
    d = _coord_dict(coords, batch)
    N = coords.shape[0]
    idx = np.full((len(offs), N), -1, np.int32)
    for k, (dx, dy, dz) in enumerate(offs):
        for i in range(N):
            idx[k, i] = d.get(
                (int(batch[i]), int(coords[i, 0] + dx),
                 int(coords[i, 1] + dy), int(coords[i, 2] + dz)), -1)
    return idx


def downsample_map(coords, batch):
    """SparseConv3d(k=2, stride=2): out coords = unique(coords // 2)."""
    d = _coord_dict(coords, batch)
    coarse = coords // 2
    seen, keys = {}, []
    for b, c in zip(batch, coarse):
        k = (int(b), int(c[0]), int(c[1]), int(c[2]))
        if k not in seen:
            seen[k] = len(keys)
            keys.append(k)
    out_batch = np.array([k[0] for k in keys], np.int64)
    out_coords = np.array([[k[1], k[2], k[3]] for k in keys], np.int64)
    offs = list(product(range(2), repeat=3))
    M = len(keys)
    idx = np.full((8, M), -1, np.int32)
    for k, (dx, dy, dz) in enumerate(offs):
        for m in range(M):
            idx[k, m] = d.get(
                (int(out_batch[m]), int(out_coords[m, 0] * 2 + dx),
                 int(out_coords[m, 1] * 2 + dy), int(out_coords[m, 2] * 2 + dz)), -1)
    return out_coords, out_batch, idx


def inverse_map(fine_coords, fine_batch, coarse_coords, coarse_batch):
    """SparseInverseConv3d(k=2) rulebook: each fine voxel pulls from coarse voxel c//2
    through exactly one kernel offset (c mod 2)."""
    cd = _coord_dict(coarse_coords, coarse_batch)
    offs = list(product(range(2), repeat=3))
    N = fine_coords.shape[0]
    idx = np.full((8, N), -1, np.int32)
    for i in range(N):
        c = fine_coords[i]
        p = c // 2
        off = (int(c[0] - 2 * p[0]), int(c[1] - 2 * p[1]), int(c[2] - 2 * p[2]))
        k = offs.index(off)
        idx[k, i] = cd[(int(fine_batch[i]), int(p[0]), int(p[1]), int(p[2]))]
    return idx


# ----------------------------------------------------------------------------
# Parameters
# ----------------------------------------------------------------------------
class _KeyGen:
    def __init__(self, key):
        self.key = key
        self.i = 0

    def __call__(self):
        self.i += 1
        return jax.random.fold_in(self.key, self.i)


def conv_weight(kg, K, cin, cout):
    # trunc_normal_(std=0.02) approximated with normal * 0.02 (synthetic weights)
    return jax.random.normal(kg(), (K, cin, cout), jnp.float32) * 0.02


def bn_fold(cout):
    gamma = jnp.ones((cout,), jnp.float32)
    beta = jnp.zeros((cout,), jnp.float32)
    mean = jnp.zeros((cout,), jnp.float32)
    var = jnp.ones((cout,), jnp.float32)
    scale = gamma / jnp.sqrt(var + BN_EPS)
    shift = beta - mean * scale
    return scale, shift


def make_block_params(kg, cin, cout):
    p = {
        "w1": conv_weight(kg, 27, cin, cout), "bn1": bn_fold(cout),
        "w2": conv_weight(kg, 27, cout, cout), "bn2": bn_fold(cout),
    }
    if cin != cout:
        p["wproj"] = conv_weight(kg, 1, cin, cout)
        p["bnp"] = bn_fold(cout)
    return p


def basic_block(feat, nmap, p):
    out = spconv(feat, nmap, p["w1"], *p["bn1"], relu=True)
    if "wproj" in p:
        res = spconv(feat, None, p["wproj"], *p["bnp"], relu=False)
    else:
        res = feat
    # residual add + ReLU fused into the second conv's epilogue
    return spconv(out, nmap, p["w2"], *p["bn2"], relu=True, residual=res)


# ----------------------------------------------------------------------------
# Model
# ----------------------------------------------------------------------------
class SpUNetBaseFPN:
    def __init__(self, in_channels, num_classes, base_channels=32,
                 channels=(32, 64, 128, 256, 256, 128, 96, 96),
                 layers=(2, 3, 4, 6, 2, 2, 2, 2), key=None):
        assert len(layers) % 2 == 0 and len(layers) == len(channels)
        self.num_stages = len(layers) // 2
        self.channels = channels
        self.layers = layers
        kg = _KeyGen(key)

        p = {"stem": {"w": conv_weight(kg, 5 ** 3, in_channels, base_channels),
                      "bn": bn_fold(base_channels)}}
        enc_channels = base_channels
        dec_channels = channels[-1]
        down, enc, up, dec = [], [], [], []
        for s in range(self.num_stages):
            down.append({"w": conv_weight(kg, 8, enc_channels, channels[s]),
                         "bn": bn_fold(channels[s])})
            enc.append([make_block_params(kg, channels[s], channels[s])
                        for _ in range(layers[s])])
            up.append({"w": conv_weight(kg, 8, channels[len(channels) - s - 2], dec_channels),
                       "bn": bn_fold(dec_channels)})
            dec_blocks = []
            for i in range(layers[len(channels) - s - 1]):
                cin = dec_channels + enc_channels if i == 0 else dec_channels
                dec_blocks.append(make_block_params(kg, cin, dec_channels))
            dec.append(dec_blocks)
            enc_channels = channels[s]
            dec_channels = channels[len(channels) - s - 2]
        p.update(down=down, enc=enc, up=up, dec=dec)
        p["final"] = {"w": conv_weight(kg, 1, channels[-1], num_classes),
                      "b": jnp.zeros((num_classes,), jnp.float32)}
        self.params = p

    def forward(self, grid_coord, feat, offset):
        coords0 = np.asarray(jax.device_get(grid_coord)).astype(np.int64)
        offset_np = np.asarray(jax.device_get(offset)).astype(np.int64)
        batch0 = offset2batch(offset_np)
        ns = self.num_stages

        # --- rulebooks (host glue; spconv builds the same thing internally) ---
        level_coords = [(coords0, batch0)]
        stem_idx = subm_neighbor_map(coords0, batch0, 5)      # indice_key='stem'
        subm_idx = {0: subm_neighbor_map(coords0, batch0, 3)}  # 'subm0'
        down_idx = []
        cc, cb = coords0, batch0
        for s in range(ns):
            oc, ob, didx = downsample_map(cc, cb)              # 'spconv{s+1}'
            down_idx.append(didx)
            cc, cb = oc, ob
            level_coords.append((cc, cb))
            subm_idx[s + 1] = subm_neighbor_map(cc, cb, 3)     # 'subm{s+1}'
        inv_idx = [inverse_map(level_coords[s][0], level_coords[s][1],
                               level_coords[s + 1][0], level_coords[s + 1][1])
                   for s in range(ns)]

        feat = jnp.asarray(feat, jnp.float32)
        p = self.params

        # --- conv_input ---
        x = spconv(feat, stem_idx, p["stem"]["w"], *p["stem"]["bn"], relu=True)
        skips = [x]

        # --- encoder ---
        for s in range(ns):
            x = spconv(x, down_idx[s], p["down"][s]["w"],
                       *p["down"][s]["bn"], relu=True)
            for blk in p["enc"][s]:
                x = basic_block(x, subm_idx[s + 1], blk)
            skips.append(x)

        # --- decoder + feature pyramid (what forward() returns) ---
        pyramid = []
        x = skips.pop(-1)
        pyramid.append((x, level_coords[ns][0], level_coords[ns][1]))  # enc[-1] hook
        for s in reversed(range(ns)):
            x = spconv(x, inv_idx[s], p["up"][s]["w"], *p["up"][s]["bn"], relu=True)
            skip = skips.pop(-1)
            # TODO(synk): the [N, Cdec+Cenc] concat could be avoided by splitting the
            # first decoder-block weight along Cin and accumulating two dots in-kernel.
            x = jnp.concatenate([x, skip], axis=1)
            for blk in p["dec"][s]:
                x = basic_block(x, subm_idx[s], blk)
            pyramid.append((x, level_coords[s][0], level_coords[s][1]))  # dec[s] hook

        # self.final(x) is computed in the reference but its result is discarded
        # (forward returns the FeaturePyramid); compute it for fidelity.
        _ = spconv(x, None, p["final"]["w"],
                   jnp.ones_like(p["final"]["b"]), p["final"]["b"], relu=False)
        return pyramid


# ----------------------------------------------------------------------------
if __name__ == "__main__":
    key = jax.random.PRNGKey(0)
    k_pts1, k_pts2, k_feat, k_params = jax.random.split(key, 4)

    # small config consistent with the module's constructor
    in_channels, num_classes = 4, 5
    base_channels = 8
    channels = (8, 16, 16, 16, 16, 16, 8, 8)
    layers = (1, 1, 1, 1, 1, 1, 1, 1)

    # two point-cloud batches of unique voxels inside a 16^3 grid
    n1, n2, grid = 96, 80, 16
    c1 = jnp.stack(jnp.unravel_index(
        jax.random.permutation(k_pts1, grid ** 3)[:n1], (grid,) * 3), axis=1)
    c2 = jnp.stack(jnp.unravel_index(
        jax.random.permutation(k_pts2, grid ** 3)[:n2], (grid,) * 3), axis=1)
    grid_coord = jnp.concatenate([c1, c2], axis=0).astype(jnp.int32)   # [176, 3]
    feat = jax.random.normal(k_feat, (n1 + n2, in_channels), jnp.float32)  # [176, 4]
    offset = jnp.array([n1, n1 + n2], jnp.int32)                        # [2]

    model = SpUNetBaseFPN(in_channels, num_classes, base_channels,
                          channels, layers, key=k_params)
    pyramid = model.forward(grid_coord, feat, offset)

    for f, _, _ in pyramid:
        jax.block_until_ready(f)

    # sanity: channel counts of pyramid levels match the reference architecture
    expect = [channels[model.num_stages - 1]] + \
             [channels[len(channels) - s - 1] for s in reversed(range(model.num_stages))]
    got = [int(f.shape[1]) for f, _, _ in pyramid]
    assert got == expect, (got, expect)
    assert len(pyramid) == model.num_stages + 1
    for f, _, _ in pyramid:
        assert bool(jnp.all(jnp.isfinite(f)))

    print("KERNEL_OK")
</pallas_src>

<mosaic_0001>
module attributes {stable_mosaic.version = 11 : i64} {
  func.func @kernel(%arg0: i32, %arg1: i32, %arg2: memref<256x512xbf16, #tpu.memory_space<vmem>>, %arg3: memref<512x128xbf16, #tpu.memory_space<vmem>>, %arg4: memref<1x128xf32, #tpu.memory_space<vmem>>, %arg5: memref<1x128xf32, #tpu.memory_space<vmem>>, %arg6: memref<256x128xf32, #tpu.memory_space<vmem>>, %arg7: memref<256x128xf32, #tpu.memory_space<vmem>>) attributes {dimension_semantics = [#tpu.dimension_semantics<parallel>, #tpu.dimension_semantics<arbitrary>], iteration_bounds = array<i64: 1, 1>, scalar_prefetch = 0 : i64, scratch_operands = 1 : i64, tpu.core_type = #tpu.core_type<tc>, window_params = [{transform_indices = @transform_0, window_bounds = array<i64: 256, 512>}, {transform_indices = @transform_1, window_bounds = array<i64: 512, 128>}, {pipeline_mode = #tpu.pipeline_mode<synchronous>, transform_indices = @transform_2, window_bounds = array<i64: 1, 128>}, {pipeline_mode = #tpu.pipeline_mode<synchronous>, transform_indices = @transform_3, window_bounds = array<i64: 1, 128>}, {transform_indices = @transform_4, window_bounds = array<i64: 256, 128>}]} {
    %c0_i32 = arith.constant 0 : i32
    %0 = arith.cmpi eq, %arg1, %c0_i32 : i32
    %1 = arith.extui %0 : i1 to i32
    %c0_i32_0 = arith.constant 0 : i32
    %2 = arith.cmpi ne, %1, %c0_i32_0 : i32
    scf.if %2 {
      %cst_10 = arith.constant 0.000000e+00 : f32
      %12 = vector.broadcast %cst_10 : f32 to vector<256x128xf32>
      %c0_11 = arith.constant 0 : index
      %c0_12 = arith.constant 0 : index
      %13 = vector.load %arg7[%c0_11, %c0_12] : memref<256x128xf32, #tpu.memory_space<vmem>>, vector<256x128xf32>
      tpu.vector_store %arg7[%c0_11, %c0_12], %12 {strides = array<i32>} : memref<256x128xf32, #tpu.memory_space<vmem>>, vector<256x128xf32>,
    } else {
    }
    %c0 = arith.constant 0 : index
    %c0_1 = arith.constant 0 : index
    %3 = vector.load %arg7[%c0, %c0_1] : memref<256x128xf32, #tpu.memory_space<vmem>>, vector<256x128xf32>
    %c0_2 = arith.constant 0 : index
    %c0_3 = arith.constant 0 : index
    %4 = vector.load %arg2[%c0_2, %c0_3] : memref<256x512xbf16, #tpu.memory_space<vmem>>, vector<256x512xbf16>
    %c0_4 = arith.constant 0 : index
    %c0_5 = arith.constant 0 : index
    %5 = vector.load %arg3[%c0_4, %c0_5] : memref<512x128xbf16, #tpu.memory_space<vmem>>, vector<512x128xbf16>
    %cst = arith.constant dense<0.000000e+00> : vector<256x128xf32>
    %6 = tpu.matmul %4, %5, %cst {dimension_numbers = #tpu.dot_dimension_numbers<[1], [0], [0], [1], [0, 0, 1, 1], [], []>} : vector<256x512xbf16>, vector<512x128xbf16>, vector<256x128xf32> -> vector<256x128xf32>
    %7 = arith.addf %3, %6 : vector<256x128xf32>
    %c0_6 = arith.constant 0 : index
    %c0_7 = arith.constant 0 : index
    %8 = vector.load %arg7[%c0_6, %c0_7] : memref<256x128xf32, #tpu.memory_space<vmem>>, vector<256x128xf32>
    tpu.vector_store %arg7[%c0_6, %c0_7], %7 {strides = array<i32>} : memref<256x128xf32, #tpu.memory_space<vmem>>, vector<256x128xf32>,
    %c0_i32_8 = arith.constant 0 : i32
    %9 = arith.cmpi eq, %arg1, %c0_i32_8 : i32
    %10 = arith.extui %9 : i1 to i32
    %c0_i32_9 = arith.constant 0 : i32
    %11 = arith.cmpi ne, %10, %c0_i32_9 : i32
    scf.if %11 {
      %c0_10 = arith.constant 0 : index
      %c0_11 = arith.constant 0 : index
      %12 = vector.load %arg7[%c0_10, %c0_11] : memref<256x128xf32, #tpu.memory_space<vmem>>, vector<256x128xf32>
      %c0_12 = arith.constant 0 : index
      %c0_13 = arith.constant 0 : index
      %13 = vector.load %arg4[%c0_12, %c0_13] : memref<1x128xf32, #tpu.memory_space<vmem>>, vector<1x128xf32>
      %14 = vector.broadcast %13 : vector<1x128xf32> to vector<256x128xf32>
      %15 = arith.mulf %12, %14 : vector<256x128xf32>
      %c0_14 = arith.constant 0 : index
      %c0_15 = arith.constant 0 : index
      %16 = vector.load %arg5[%c0_14, %c0_15] : memref<1x128xf32, #tpu.memory_space<vmem>>, vector<1x128xf32>
      %17 = vector.broadcast %16 : vector<1x128xf32> to vector<256x128xf32>
      %18 = arith.addf %15, %17 : vector<256x128xf32>
      %cst_16 = arith.constant 0.000000e+00 : f32
      %19 = vector.broadcast %cst_16 : f32 to vector<256x128xf32>
      %20 = arith.maximumf %18, %19 : vector<256x128xf32>
      %c0_17 = arith.constant 0 : index
      %c0_18 = arith.constant 0 : index
      %21 = vector.load %arg6[%c0_17, %c0_18] : memref<256x128xf32, #tpu.memory_space<vmem>>, vector<256x128xf32>
      tpu.vector_store %arg6[%c0_17, %c0_18], %20 {strides = array<i32>} : memref<256x128xf32, #tpu.memory_space<vmem>>, vector<256x128xf32>,
    } else {
    }
    return
  }
  func.func @transform_0(%arg0: i32, %arg1: i32) -> (i32, i32) {
    %c0_i32 = arith.constant 0 : i32
    return %arg0, %arg1 : i32, i32
  }
  func.func @transform_1(%arg0: i32, %arg1: i32) -> (i32, i32) {
    %c0_i32 = arith.constant 0 : i32
    %c0_i32_0 = arith.constant 0 : i32
    return %arg1, %c0_i32 : i32, i32
  }
  func.func @transform_2(%arg0: i32, %arg1: i32) -> (i32, i32) {
    %c0_i32 = arith.constant 0 : i32
    %c0_i32_0 = arith.constant 0 : i32
    %c0_i32_1 = arith.constant 0 : i32
    return %c0_i32, %c0_i32_0 : i32, i32
  }
  func.func @transform_3(%arg0: i32, %arg1: i32) -> (i32, i32) {
    %c0_i32 = arith.constant 0 : i32
    %c0_i32_0 = arith.constant 0 : i32
    %c0_i32_1 = arith.constant 0 : i32
    return %c0_i32, %c0_i32_0 : i32, i32
  }
  func.func @transform_4(%arg0: i32, %arg1: i32) -> (i32, i32) {
    %c0_i32 = arith.constant 0 : i32
    %c0_i32_0 = arith.constant 0 : i32
    return %arg0, %c0_i32 : i32, i32
  }
}

</mosaic_0001>

<llo_original>
// kernel: tpu_custom_call.1
$region0: #{tpu_custom_call.1}
  #allocation0 [shape = 'u32[]', space=smem, size = 0x4, offset = 0x4, fixed_abs, tag = 'smem constant byte address 0x4 - core index']
  #allocation1 [shape = 'u32[72,128]{1,0:T(1,128)}', space=vmem, size = 0x9000, scoped, tag = 'internal scratch']
  #allocation2 [shape = 'f32[256,128]{1,0:T(8,128)}', space=vmem, size = 0x20000, scoped, tag = 'scratch operand']
  %s0 = inlined_call_operand.hbm [shape: bf16[256,512], index: 0, kind: input, shape index: {}]
  %s1 = inlined_call_operand.hbm [shape: bf16[512,128], index: 1, kind: input, shape index: {}]
  %s2 = inlined_call_operand.vmem [shape: f32[1,128], index: 2, kind: input, shape index: {}]
  %s3 = inlined_call_operand.vmem [shape: f32[1,128], index: 3, kind: input, shape index: {}]
  %s4 = inlined_call_operand.hbm [shape: f32[256,128], index: 4, kind: output, shape index: {}]
  %s5 = sld [smem:[#allocation0]]
  $region42: #{tpu_custom_call.1} parent=0
    _
  %s7 = ssub.s32 1, %s5
  %s8 = scalar_select 0, %s7, %s5
  $region1: #{tpu_custom_call.1} parent=0
    #allocation3 [shape = 'u8[262144]{0}', space=vmem, size = 0x40000, scoped, tag = 'input window, operand 0, single buffered']
    #allocation4 [shape = 's32[1]{0}', space=sflag, size = 0x4, scoped, tag = 'scoped memory for tpu_custom_call.1']
    #allocation5 [shape = 's32[1]{0}', space=sflag, size = 0x4, scoped, tag = 'scoped memory for tpu_custom_call.1']
    #allocation6 [shape = 'u8[131072]{0}', space=vmem, size = 0x20000, scoped, tag = 'input window, operand 1, single buffered']
    #allocation7 [shape = 's32[1]{0}', space=sflag, size = 0x4, scoped, tag = 'scoped memory for tpu_custom_call.1']
    #allocation8 [shape = 'u8[131072]{0}', space=vmem, size = 0x20000, scoped, tag = 'output window, operand 0, single buffered']
    %9 = vsyncpa [#allocation4], 0
    %10 = vsyncpa [#allocation7], 0
    %11 = vsyncpa [#allocation5], 0
    // Predicated region
    $region2: #{tpu_custom_call.1} parent=1 // pred_check
      _
    $region3: #{tpu_custom_call.1} parent=1 // pred_check_branch
      %13 = sbr.rel (0) target = $region5
    $region4: #{tpu_custom_call.1} parent=1 // pred_region
      %15 = vsyncadd [#allocation4], 0
      %s16 = sshll.u32 %s0, 4
      %s17 = int_to_ptr.hbm [resolvable:$true] %s16
      %s18 = sshll.u32 [#allocation3], 4
      %s19 = int_to_ptr.vmem [resolvable:$true] %s18
      %24 = dma.hbm_to_vmem [thread:$0]  %s17, 8192, %s19, [#allocation4], 256, 256, 16
    $region5: #{tpu_custom_call.1} parent=1 // pred_fallthru
      _
    // Predicated region
    $region6: #{tpu_custom_call.1} parent=1 // pred_check
      _
    $region7: #{tpu_custom_call.1} parent=1 // pred_check_branch
      %26 = sbr.rel (0) target = $region9
    $region8: #{tpu_custom_call.1} parent=1 // pred_region
      %28 = vsyncadd [#allocation7], 0
      %s29 = sshll.u32 %s1, 4
      %s30 = int_to_ptr.hbm [resolvable:$true] %s29
      %s31 = sshll.u32 [#allocation6], 4
      %s32 = int_to_ptr.vmem [resolvable:$true] %s31
      %37 = dma.hbm_to_vmem [thread:$0]  %s30, 4096, %s32, [#allocation7], 64, 64, 4
    $region9: #{tpu_custom_call.1} parent=1 // pred_fallthru
      _
    // Predicated region
    $region10: #{tpu_custom_call.1} parent=1 // pred_check
      _
    $region11: #{tpu_custom_call.1} parent=1 // pred_check_branch
      %39 = sbr.rel (0) target = $region13
    $region12: #{tpu_custom_call.1} parent=1 // pred_region
      _
    $region13: #{tpu_custom_call.1} parent=1 // pred_fallthru
      _
    // Predicated region
    $region14: #{tpu_custom_call.1} parent=1 // pred_check
      _
    $region15: #{tpu_custom_call.1} parent=1 // pred_check_branch
      %41 = sbr.rel (0) target = $region17
    $region16: #{tpu_custom_call.1} parent=1 // pred_region
      _
    $region17: #{tpu_custom_call.1} parent=1 // pred_fallthru
      _
    // Predicated region
    $region18: #{tpu_custom_call.1} parent=1 // pred_check
      _
    $region19: #{tpu_custom_call.1} parent=1 // pred_check_branch
      %43 = sbr.rel (0) target = $region21
    $region20: #{tpu_custom_call.1} parent=1 // pred_region
      %45 = dma.done [#allocation4], 8192
    $region21: #{tpu_custom_call.1} parent=1 // pred_fallthru
      _
    // Predicated region
    $region22: #{tpu_custom_call.1} parent=1 // pred_check
      _
    $region23: #{tpu_custom_call.1} parent=1 // pred_check_branch
      %47 = sbr.rel (0) target = $region25
    $region24: #{tpu_custom_call.1} parent=1 // pred_region
      %49 = dma.done [#allocation7], 4096
    $region25: #{tpu_custom_call.1} parent=1 // pred_fallthru
      _
    %p50 = scmp.eq.s32.totalorder 0, 0
    // Predicated region
    $region26: #{tpu_custom_call.1} parent=1 // pred_check
      %p51 = pneg %p50
    $region27: #{tpu_custom_call.1} parent=1 // pred_check_branch
      %53 = sbr.rel (%p51) target = $region29
    $region28: #{tpu_custom_call.1} parent=1 // pred_region
      %54 = vst [vmem:[#allocation2] sm:$0xff] 0.0
      %55 = vst [vmem:[#allocation2 + $0x8] sm:$0xff] 0.0
      %56 = vst [vmem:[#allocation2 + $0x10] sm:$0xff] 0.0
      %57 = vst [vmem:[#allocation2 + $0x18] sm:$0xff] 0.0
      %58 = vst [vmem:[#allocation2 + $0x20] sm:$0xff] 0.0
      %59 = vst [vmem:[#allocation2 + $0x28] sm:$0xff] 0.0
      %60 = vst [vmem:[#allocation2 + $0x30] sm:$0xff] 0.0
      %61 = vst [vmem:[#allocation2 + $0x38] sm:$0xff] 0.0
      %62 = vst [vmem:[#allocation2 + $0x40] sm:$0xff] 0.0
      %63 = vst [vmem:[#allocation2 + $0x48] sm:$0xff] 0.0
      %64 = vst [vmem:[#allocation2 + $0x50] sm:$0xff] 0.0
      %65 = vst [vmem:[#allocation2 + $0x58] sm:$0xff] 0.0
      %66 = vst [vmem:[#allocation2 + $0x60] sm:$0xff] 0.0
      %67 = vst [vmem:[#allocation2 + $0x68] sm:$0xff] 0.0
      %68 = vst [vmem:[#allocation2 + $0x70] sm:$0xff] 0.0
      %69 = vst [vmem:[#allocation2 + $0x78] sm:$0xff] 0.0
      %70 = vst [vmem:[#allocation2 + $0x80] sm:$0xff] 0.0
      %71 = vst [vmem:[#allocation2 + $0x88] sm:$0xff] 0.0
      %72 = vst [vmem:[#allocation2 + $0x90] sm:$0xff] 0.0
      %73 = vst [vmem:[#allocation2 + $0x98] sm:$0xff] 0.0
      %74 = vst [vmem:[#allocation2 + $0xa0] sm:$0xff] 0.0
      %75 = vst [vmem:[#allocation2 + $0xa8] sm:$0xff] 0.0
      %76 = vst [vmem:[#allocation2 + $0xb0] sm:$0xff] 0.0
      %77 = vst [vmem:[#allocation2 + $0xb8] sm:$0xff] 0.0
      %78 = vst [vmem:[#allocation2 + $0xc0] sm:$0xff] 0.0
      %79 = vst [vmem:[#allocation2 + $0xc8] sm:$0xff] 0.0
      %80 = vst [vmem:[#allocation2 + $0xd0] sm:$0xff] 0.0
      %81 = vst [vmem:[#allocation2 + $0xd8] sm:$0xff] 0.0
      %82 = vst [vmem:[#allocation2 + $0xe0] sm:$0xff] 0.0
      %83 = vst [vmem:[#allocation2 + $0xe8] sm:$0xff] 0.0
      %84 = vst [vmem:[#allocation2 + $0xf0] sm:$0xff] 0.0
      %85 = vst [vmem:[#allocation2 + $0xf8] sm:$0xff] 0.0
    $region29: #{tpu_custom_call.1} parent=1 // pred_fallthru
      _
    %v86 = vld [vmem:[#allocation2] sm:$0xff]
    %v87 = vld [vmem:[#allocation2 + $0x8] sm:$0xff]
    %v88 = vld [vmem:[#allocation2 + $0x10] sm:$0xff]
    %v89 = vld [vmem:[#allocation2 + $0x18] sm:$0xff]
    %v90 = vld [vmem:[#allocation2 + $0x20] sm:$0xff]
    %v91 = vld [vmem:[#allocation2 + $0x28] sm:$0xff]
    %v92 = vld [vmem:[#allocation2 + $0x30] sm:$0xff]
    %v93 = vld [vmem:[#allocation2 + $0x38] sm:$0xff]
    %v94 = vld [vmem:[#allocation2 + $0x40] sm:$0xff]
    %v95 = vld [vmem:[#allocation2 + $0x48] sm:$0xff]
    %v96 = vld [vmem:[#allocation2 + $0x50] sm:$0xff]
    %v97 = vld [vmem:[#allocation2 + $0x58] sm:$0xff]
    %v98 = vld [vmem:[#allocation2 + $0x60] sm:$0xff]
    %v99 = vld [vmem:[#allocation2 + $0x68] sm:$0xff]
    %v100 = vld [vmem:[#allocation2 + $0x70] sm:$0xff]
    %v101 = vld [vmem:[#allocation2 + $0x78] sm:$0xff]
    %v102 = vld [vmem:[#allocation2 + $0x80] sm:$0xff]
    %v103 = vld [vmem:[#allocation2 + $0x88] sm:$0xff]
    %v104 = vld [vmem:[#allocation2 + $0x90] sm:$0xff]
    %v105 = vld [vmem:[#allocation2 + $0x98] sm:$0xff]
    %v106 = vld [vmem:[#allocation2 + $0xa0] sm:$0xff]
    %v107 = vld [vmem:[#allocation2 + $0xa8] sm:$0xff]
    %v108 = vld [vmem:[#allocation2 + $0xb0] sm:$0xff]
    %v109 = vld [vmem:[#allocation2 + $0xb8] sm:$0xff]
    %v110 = vld [vmem:[#allocation2 + $0xc0] sm:$0xff]
    %v111 = vld [vmem:[#allocation2 + $0xc8] sm:$0xff]
    %v112 = vld [vmem:[#allocation2 + $0xd0] sm:$0xff]
    %v113 = vld [vmem:[#allocation2 + $0xd8] sm:$0xff]
    %v114 = vld [vmem:[#allocation2 + $0xe0] sm:$0xff]
    %v115 = vld [vmem:[#allocation2 + $0xe8] sm:$0xff]
    %v116 = vld [vmem:[#allocation2 + $0xf0] sm:$0xff]
    %v117 = vld [vmem:[#allocation2 + $0xf8] sm:$0xff]
    %v118 = vld [vmem:[#allocation3] sm:$0xff]
    %v119 = vld [vmem:[#allocation3 + $0x8] sm:$0xff]
    %v120 = vld [vmem:[#allocation3 + $0x10] sm:$0xff]
    %v121 = vld [vmem:[#allocation3 + $0x18] sm:$0xff]
    %v122 = vld [vmem:[#allocation3 + $0x20] sm:$0xff]
    %v123 = vld [vmem:[#allocation3 + $0x28] sm:$0xff]
    %v124 = vld [vmem:[#allocation3 + $0x30] sm:$0xff]
    %v125 = vld [vmem:[#allocation3 + $0x38] sm:$0xff]
    %v126 = vld [vmem:[#allocation3 + $0x40] sm:$0xff]
    %v127 = vld [vmem:[#allocation3 + $0x48] sm:$0xff]
    %v128 = vld [vmem:[#allocation3 + $0x50] sm:$0xff]
    %v129 = vld [vmem:[#allocation3 + $0x58] sm:$0xff]
    %v130 = vld [vmem:[#allocation3 + $0x60] sm:$0xff]
    %v131 = vld [vmem:[#allocation3 + $0x68] sm:$0xff]
    %v132 = vld [vmem:[#allocation3 + $0x70] sm:$0xff]
    %v133 = vld [vmem:[#allocation3 + $0x78] sm:$0xff]
    %v134 = vld [vmem:[#allocation3 + $0x80] sm:$0xff]
    %v135 = vld [vmem:[#allocation3 + $0x88] sm:$0xff]
    %v136 = vld [vmem:[#allocation3 + $0x90] sm:$0xff]
    %v137 = vld [vmem:[#allocation3 + $0x98] sm:$0xff]
    %v138 = vld [vmem:[#allocation3 + $0xa0] sm:$0xff]
    %v139 = vld [vmem:[#allocation3 + $0xa8] sm:$0xff]
    %v140 = vld [vmem:[#allocation3 + $0xb0] sm:$0xff]
    %v141 = vld [vmem:[#allocation3 + $0xb8] sm:$0xff]
    %v142 = vld [vmem:[#allocation3 + $0xc0] sm:$0xff]
    %v143 = vld [vmem:[#allocation3 + $0xc8] sm:$0xff]
    %v144 = vld [vmem:[#allocation3 + $0xd0] sm:$0xff]
    %v145 = vld [vmem:[#allocation3 + $0xd8] sm:$0xff]
    %v146 = vld [vmem:[#allocation3 + $0xe0] sm:$0xff]
    %v147 = vld [vmem:[#allocation3 + $0xe8] sm:$0xff]
    %v148 = vld [vmem:[#allocation3 + $0xf0] sm:$0xff]
    %v149 = vld [vmem:[#allocation3 + $0xf8] sm:$0xff]
    %v150 = vld [vmem:[#allocation3 + $0x100] sm:$0xff]
    %v151 = vld [vmem:[#allocation3 + $0x108] sm:$0xff]
    %v152 = vld [vmem:[#allocation3 + $0x110] sm:$0xff]
    %v153 = vld [vmem:[#allocation3 + $0x118] sm:$0xff]
    %v154 = vld [vmem:[#allocation3 + $0x120] sm:$0xff]
    %v155 = vld [vmem:[#allocation3 + $0x128] sm:$0xff]
    %v156 = vld [vmem:[#allocation3 + $0x130] sm:$0xff]
    %v157 = vld [vmem:[#allocation3 + $0x138] sm:$0xff]
    %v158 = vld [vmem:[#allocation3 + $0x140] sm:$0xff]
    %v159 = vld [vmem:[#allocation3 + $0x148] sm:$0xff]
    %v160 = vld [vmem:[#allocation3 + $0x150] sm:$0xff]
    %v161 = vld [vmem:[#allocation3 + $0x158] sm:$0xff]
    %v162 = vld [vmem:[#allocation3 + $0x160] sm:$0xff]
    %v163 = vld [vmem:[#allocation3 + $0x168] sm:$0xff]
    %v164 = vld [vmem:[#allocation3 + $0x170] sm:$0xff]
    %v165 = vld [vmem:[#allocation3 + $0x178] sm:$0xff]
    %v166 = vld [vmem:[#allocation3 + $0x180] sm:$0xff]
    %v167 = vld [vmem:[#allocation3 + $0x188] sm:$0xff]
    %v168 = vld [vmem:[#allocation3 + $0x190] sm:$0xff]
    %v169 = vld [vmem:[#allocation3 + $0x198] sm:$0xff]
    %v170 = vld [vmem:[#allocation3 + $0x1a0] sm:$0xff]
    %v171 = vld [vmem:[#allocation3 + $0x1a8] sm:$0xff]
    %v172 = vld [vmem:[#allocation3 + $0x1b0] sm:$0xff]
    %v173 = vld [vmem:[#allocation3 + $0x1b8] sm:$0xff]
    %v174 = vld [vmem:[#allocation3 + $0x1c0] sm:$0xff]
    %v175 = vld [vmem:[#allocation3 + $0x1c8] sm:$0xff]
    %v176 = vld [vmem:[#allocation3 + $0x1d0] sm:$0xff]
    %v177 = vld [vmem:[#allocation3 + $0x1d8] sm:$0xff]
    %v178 = vld [vmem:[#allocation3 + $0x1e0] sm:$0xff]
    %v179 = vld [vmem:[#allocation3 + $0x1e8] sm:$0xff]
    %v180 = vld [vmem:[#allocation3 + $0x1f0] sm:$0xff]
    %v181 = vld [vmem:[#allocation3 + $0x1f8] sm:$0xff]
    %v182 = vld [vmem:[#allocation6] sm:$0xf]
    %v183 = vld [vmem:[#allocation6 + $0x4] sm:$0xf]
    %v184 = vld [vmem:[#allocation6 + $0x8] sm:$0xf]
    %v185 = vld [vmem:[#allocation6 + $0xc] sm:$0xf]
    %v186 = vld [vmem:[#allocation6 + $0x10] sm:$0xf]
    %v187 = vld [vmem:[#allocation6 + $0x14] sm:$0xf]
    %v188 = vld [vmem:[#allocation6 + $0x18] sm:$0xf]
    %v189 = vld [vmem:[#allocation6 + $0x1c] sm:$0xf]
    %v190 = vld [vmem:[#allocation6 + $0x20] sm:$0xf]
    %v191 = vld [vmem:[#allocation6 + $0x24] sm:$0xf]
    %v192 = vld [vmem:[#allocation6 + $0x28] sm:$0xf]
    %v193 = vld [vmem:[#allocation6 + $0x2c] sm:$0xf]
    %v194 = vld [vmem:[#allocation6 + $0x30] sm:$0xf]
    %v195 = vld [vmem:[#allocation6 + $0x34] sm:$0xf]
    %v196 = vld [vmem:[#allocation6 + $0x38] sm:$0xf]
    %v197 = vld [vmem:[#allocation6 + $0x3c] sm:$0xf]
    %v198 = vld [vmem:[#allocation6 + $0x40] sm:$0xf]
    %v199 = vld [vmem:[#allocation6 + $0x44] sm:$0xf]
    %v200 = vld [vmem:[#allocation6 + $0x48] sm:$0xf]
    %v201 = vld [vmem:[#allocation6 + $0x4c] sm:$0xf]
    %v202 = vld [vmem:[#allocation6 + $0x50] sm:$0xf]
    %v203 = vld [vmem:[#allocation6 + $0x54] sm:$0xf]
    %v204 = vld [vmem:[#allocation6 + $0x58] sm:$0xf]
    %v205 = vld [vmem:[#allocation6 + $0x5c] sm:$0xf]
    %v206 = vld [vmem:[#allocation6 + $0x60] sm:$0xf]
    %v207 = vld [vmem:[#allocation6 + $0x64] sm:$0xf]
    %v208 = vld [vmem:[#allocation6 + $0x68] sm:$0xf]
    %v209 = vld [vmem:[#allocation6 + $0x6c] sm:$0xf]
    %v210 = vld [vmem:[#allocation6 + $0x70] sm:$0xf]
    %v211 = vld [vmem:[#allocation6 + $0x74] sm:$0xf]
    %v212 = vld [vmem:[#allocation6 + $0x78] sm:$0xf]
    %v213 = vld [vmem:[#allocation6 + $0x7c] sm:$0xf]
    %v214 = vld [vmem:[#allocation6 + $0x80] sm:$0xf]
    %v215 = vld [vmem:[#allocation6 + $0x84] sm:$0xf]
    %v216 = vld [vmem:[#allocation6 + $0x88] sm:$0xf]
    %v217 = vld [vmem:[#allocation6 + $0x8c] sm:$0xf]
    %v218 = vld [vmem:[#allocation6 + $0x90] sm:$0xf]
    %v219 = vld [vmem:[#allocation6 + $0x94] sm:$0xf]
    %v220 = vld [vmem:[#allocation6 + $0x98] sm:$0xf]
    %v221 = vld [vmem:[#allocation6 + $0x9c] sm:$0xf]
    %v222 = vld [vmem:[#allocation6 + $0xa0] sm:$0xf]
    %v223 = vld [vmem:[#allocation6 + $0xa4] sm:$0xf]
    %v224 = vld [vmem:[#allocation6 + $0xa8] sm:$0xf]
    %v225 = vld [vmem:[#allocation6 + $0xac] sm:$0xf]
    %v226 = vld [vmem:[#allocation6 + $0xb0] sm:$0xf]
    %v227 = vld [vmem:[#allocation6 + $0xb4] sm:$0xf]
    %v228 = vld [vmem:[#allocation6 + $0xb8] sm:$0xf]
    %v229 = vld [vmem:[#allocation6 + $0xbc] sm:$0xf]
    %v230 = vld [vmem:[#allocation6 + $0xc0] sm:$0xf]
    %v231 = vld [vmem:[#allocation6 + $0xc4] sm:$0xf]
    %v232 = vld [vmem:[#allocation6 + $0xc8] sm:$0xf]
    %v233 = vld [vmem:[#allocation6 + $0xcc] sm:$0xf]
    %v234 = vld [vmem:[#allocation6 + $0xd0] sm:$0xf]
    %v235 = vld [vmem:[#allocation6 + $0xd4] sm:$0xf]
    %v236 = vld [vmem:[#allocation6 + $0xd8] sm:$0xf]
    %v237 = vld [vmem:[#allocation6 + $0xdc] sm:$0xf]
    %v238 = vld [vmem:[#allocation6 + $0xe0] sm:$0xf]
    %v239 = vld [vmem:[#allocation6 + $0xe4] sm:$0xf]
    %v240 = vld [vmem:[#allocation6 + $0xe8] sm:$0xf]
    %v241 = vld [vmem:[#allocation6 + $0xec] sm:$0xf]
    %v242 = vld [vmem:[#allocation6 + $0xf0] sm:$0xf]
    %v243 = vld [vmem:[#allocation6 + $0xf4] sm:$0xf]
    %v244 = vld [vmem:[#allocation6 + $0xf8] sm:$0xf]
    %v245 = vld [vmem:[#allocation6 + $0xfc] sm:$0xf]
    %v310 = vunpack.c.l.b16 %v118
    %v311 = vunpack.c.h.b16 %v118
    %v312 = vunpack.c.l.b16 %v119
    %v313 = vunpack.c.h.b16 %v119
    %v314 = vunpack.c.l.b16 %v120
    %v315 = vunpack.c.h.b16 %v120
    %v316 = vunpack.c.l.b16 %v121
    %v317 = vunpack.c.h.b16 %v121
    %v318 = vunpack.c.l.b16 %v122
    %v319 = vunpack.c.h.b16 %v122
    %v320 = vunpack.c.l.b16 %v123
    %v321 = vunpack.c.h.b16 %v123
    %v322 = vunpack.c.l.b16 %v124
    %v323 = vunpack.c.h.b16 %v124
    %v324 = vunpack.c.l.b16 %v125
    %v325 = vunpack.c.h.b16 %v125
    %v326 = vunpack.c.l.b16 %v126
    %v327 = vunpack.c.h.b16 %v126
    %v328 = vunpack.c.l.b16 %v127
    %v329 = vunpack.c.h.b16 %v127
    %v330 = vunpack.c.l.b16 %v128
    %v331 = vunpack.c.h.b16 %v128
    %v332 = vunpack.c.l.b16 %v129
    %v333 = vunpack.c.h.b16 %v129
    %v334 = vunpack.c.l.b16 %v130
    %v335 = vunpack.c.h.b16 %v130
    %v336 = vunpack.c.l.b16 %v131
    %v337 = vunpack.c.h.b16 %v131
    %v338 = vunpack.c.l.b16 %v132
    %v339 = vunpack.c.h.b16 %v132
    %v340 = vunpack.c.l.b16 %v133
    %v341 = vunpack.c.h.b16 %v133
    %v342 = vunpack.c.l.b16 %v134
    %v343 = vunpack.c.h.b16 %v134
    %v344 = vunpack.c.l.b16 %v135
    %v345 = vunpack.c.h.b16 %v135
    %v346 = vunpack.c.l.b16 %v136
    %v347 = vunpack.c.h.b16 %v136
    %v348 = vunpack.c.l.b16 %v137
    %v349 = vunpack.c.h.b16 %v137
    %v350 = vunpack.c.l.b16 %v138
    %v351 = vunpack.c.h.b16 %v138
    %v352 = vunpack.c.l.b16 %v139
    %v353 = vunpack.c.h.b16 %v139
    %v354 = vunpack.c.l.b16 %v140
    %v355 = vunpack.c.h.b16 %v140
    %v356 = vunpack.c.l.b16 %v141
    %v357 = vunpack.c.h.b16 %v141
    %v358 = vunpack.c.l.b16 %v142
    %v359 = vunpack.c.h.b16 %v142
    %v360 = vunpack.c.l.b16 %v143
    %v361 = vunpack.c.h.b16 %v143
    %v362 = vunpack.c.l.b16 %v144
    %v363 = vunpack.c.h.b16 %v144
    %v364 = vunpack.c.l.b16 %v145
    %v365 = vunpack.c.h.b16 %v145
    %v366 = vunpack.c.l.b16 %v146
    %v367 = vunpack.c.h.b16 %v146
    %v368 = vunpack.c.l.b16 %v147
    %v369 = vunpack.c.h.b16 %v147
    %v370 = vunpack.c.l.b16 %v148
    %v371 = vunpack.c.h.b16 %v148
    %v372 = vunpack.c.l.b16 %v149
    %v373 = vunpack.c.h.b16 %v149
    %v374 = vunpack.c.l.b16 %v150
    %v375 = vunpack.c.h.b16 %v150
    %v376 = vunpack.c.l.b16 %v151
    %v377 = vunpack.c.h.b16 %v151
    %v378 = vunpack.c.l.b16 %v152
    %v379 = vunpack.c.h.b16 %v152
    %v380 = vunpack.c.l.b16 %v153
    %v381 = vunpack.c.h.b16 %v153
    %v382 = vunpack.c.l.b16 %v154
    %v383 = vunpack.c.h.b16 %v154
    %v384 = vunpack.c.l.b16 %v155
    %v385 = vunpack.c.h.b16 %v155
    %v386 = vunpack.c.l.b16 %v156
    %v387 = vunpack.c.h.b16 %v156
    %v388 = vunpack.c.l.b16 %v157
    %v389 = vunpack.c.h.b16 %v157
    %v390 = vunpack.c.l.b16 %v158
    %v391 = vunpack.c.h.b16 %v158
    %v392 = vunpack.c.l.b16 %v159
    %v393 = vunpack.c.h.b16 %v159
    %v394 = vunpack.c.l.b16 %v160
    %v395 = vunpack.c.h.b16 %v160
    %v396 = vunpack.c.l.b16 %v161
    %v397 = vunpack.c.h.b16 %v161
    %v398 = vunpack.c.l.b16 %v162
    %v399 = vunpack.c.h.b16 %v162
    %v400 = vunpack.c.l.b16 %v163
    %v401 = vunpack.c.h.b16 %v163
    %v402 = vunpack.c.l.b16 %v164
    %v403 = vunpack.c.h.b16 %v164
    %v404 = vunpack.c.l.b16 %v165
    %v405 = vunpack.c.h.b16 %v165
    %v406 = vunpack.c.l.b16 %v166
    %v407 = vunpack.c.h.b16 %v166
    %v408 = vunpack.c.l.b16 %v167
    %v409 = vunpack.c.h.b16 %v167
    %v410 = vunpack.c.l.b16 %v168
    %v411 = vunpack.c.h.b16 %v168
    %v412 = vunpack.c.l.b16 %v169
    %v413 = vunpack.c.h.b16 %v169
    %v414 = vunpack.c.l.b16 %v170
    %v415 = vunpack.c.h.b16 %v170
    %v416 = vunpack.c.l.b16 %v171
    %v417 = vunpack.c.h.b16 %v171
    %v418 = vunpack.c.l.b16 %v172
    %v419 = vunpack.c.h.b16 %v172
    %v420 = vunpack.c.l.b16 %v173
    %v421 = vunpack.c.h.b16 %v173
    %v422 = vunpack.c.l.b16 %v174
    %v423 = vunpack.c.h.b16 %v174
    %v424 = vunpack.c.l.b16 %v175
    %v425 = vunpack.c.h.b16 %v175
    %v426 = vunpack.c.l.b16 %v176
    %v427 = vunpack.c.h.b16 %v176
    %v428 = vunpack.c.l.b16 %v177
    %v429 = vunpack.c.h.b16 %v177
    %v430 = vunpack.c.l.b16 %v178
    %v431 = vunpack.c.h.b16 %v178
    %v432 = vunpack.c.l.b16 %v179
    %v433 = vunpack.c.h.b16 %v179
    %v434 = vunpack.c.l.b16 %v180
    %v435 = vunpack.c.h.b16 %v180
    %v436 = vunpack.c.l.b16 %v181
    %v437 = vunpack.c.h.b16 %v181
    %v438 = vpack.c.b16 %v314, %v310
    %v439 = vpack.c.b16 %v315, %v311
    %v440 = vpack.c.b16 %v316, %v312
    %v441 = vpack.c.b16 %v317, %v313
    %v442 = vpack.c.b16 %v322, %v318
    %v443 = vpack.c.b16 %v323, %v319
    %v444 = vpack.c.b16 %v324, %v320
    %v445 = vpack.c.b16 %v325, %v321
    %v446 = vpack.c.b16 %v330, %v326
    %v447 = vpack.c.b16 %v331, %v327
    %v448 = vpack.c.b16 %v332, %v328
    %v449 = vpack.c.b16 %v333, %v329
    %v450 = vpack.c.b16 %v338, %v334
    %v451 = vpack.c.b16 %v339, %v335
    %v452 = vpack.c.b16 %v340, %v336
    %v453 = vpack.c.b16 %v341, %v337
    %v454 = vpack.c.b16 %v346, %v342
    %v455 = vpack.c.b16 %v347, %v343
    %v456 = vpack.c.b16 %v348, %v344
    %v457 = vpack.c.b16 %v349, %v345
    %v458 = vpack.c.b16 %v354, %v350
    %v459 = vpack.c.b16 %v355, %v351
    %v460 = vpack.c.b16 %v356, %v352
    %v461 = vpack.c.b16 %v357, %v353
    %v462 = vpack.c.b16 %v362, %v358
    %v463 = vpack.c.b16 %v363, %v359
    %v464 = vpack.c.b16 %v364, %v360
    %v465 = vpack.c.b16 %v365, %v361
    %v466 = vpack.c.b16 %v370, %v366
    %v467 = vpack.c.b16 %v371, %v367
    %v468 = vpack.c.b16 %v372, %v368
    %v469 = vpack.c.b16 %v373, %v369
    %v470 = vpack.c.b16 %v378, %v374
    %v471 = vpack.c.b16 %v379, %v375
    %v472 = vpack.c.b16 %v380, %v376
    %v473 = vpack.c.b16 %v381, %v377
    %v474 = vpack.c.b16 %v386, %v382
    %v475 = vpack.c.b16 %v387, %v383
    %v476 = vpack.c.b16 %v388, %v384
    %v477 = vpack.c.b16 %v389, %v385
    %v478 = vpack.c.b16 %v394, %v390
    %v479 = vpack.c.b16 %v395, %v391
    %v480 = vpack.c.b16 %v396, %v392
    %v481 = vpack.c.b16 %v397, %v393
    %v482 = vpack.c.b16 %v402, %v398
    %v483 = vpack.c.b16 %v403, %v399
    %v484 = vpack.c.b16 %v404, %v400
    %v485 = vpack.c.b16 %v405, %v401
    %v486 = vpack.c.b16 %v410, %v406
    %v487 = vpack.c.b16 %v411, %v407
    %v488 = vpack.c.b16 %v412, %v408
    %v489 = vpack.c.b16 %v413, %v409
    %v490 = vpack.c.b16 %v418, %v414
    %v491 = vpack.c.b16 %v419, %v415
    %v492 = vpack.c.b16 %v420, %v416
    %v493 = vpack.c.b16 %v421, %v417
    %v494 = vpack.c.b16 %v426, %v422
    %v495 = vpack.c.b16 %v427, %v423
    %v496 = vpack.c.b16 %v428, %v424
    %v497 = vpack.c.b16 %v429, %v425
    %v498 = vpack.c.b16 %v434, %v430
    %v499 = vpack.c.b16 %v435, %v431
    %v500 = vpack.c.b16 %v436, %v432
    %v501 = vpack.c.b16 %v437, %v433
    %v630 = vunpack.c.l.b16 %v182
    %v631 = vunpack.c.l.b16 %v183
    %v632 = vunpack.c.l.b16 %v184
    %v633 = vunpack.c.l.b16 %v185
    %v634 = vunpack.c.l.b16 %v186
    %v635 = vunpack.c.l.b16 %v187
    %v636 = vunpack.c.l.b16 %v188
    %v637 = vunpack.c.l.b16 %v189
    %v638 = vunpack.c.l.b16 %v190
    %v639 = vunpack.c.l.b16 %v191
    %v640 = vunpack.c.l.b16 %v192
    %v641 = vunpack.c.l.b16 %v193
    %v642 = vunpack.c.l.b16 %v194
    %v643 = vunpack.c.l.b16 %v195
    %v644 = vunpack.c.l.b16 %v196
    %v645 = vunpack.c.l.b16 %v197
    %v646 = vunpack.c.l.b16 %v198
    %v647 = vunpack.c.l.b16 %v199
    %v648 = vunpack.c.l.b16 %v200
    %v649 = vunpack.c.l.b16 %v201
    %v650 = vunpack.c.l.b16 %v202
    %v651 = vunpack.c.l.b16 %v203
    %v652 = vunpack.c.l.b16 %v204
    %v653 = vunpack.c.l.b16 %v205
    %v654 = vunpack.c.l.b16 %v206
    %v655 = vunpack.c.l.b16 %v207
    %v656 = vunpack.c.l.b16 %v208
    %v657 = vunpack.c.l.b16 %v209
    %v658 = vunpack.c.l.b16 %v210
    %v659 = vunpack.c.l.b16 %v211
    %v660 = vunpack.c.l.b16 %v212
    %v661 = vunpack.c.l.b16 %v213
    %v662 = vunpack.c.l.b16 %v214
    %v663 = vunpack.c.l.b16 %v215
    %v664 = vunpack.c.l.b16 %v216
    %v665 = vunpack.c.l.b16 %v217
    %v666 = vunpack.c.l.b16 %v218
    %v667 = vunpack.c.l.b16 %v219
    %v668 = vunpack.c.l.b16 %v220
    %v669 = vunpack.c.l.b16 %v221
    %v670 = vunpack.c.l.b16 %v222
    %v671 = vunpack.c.l.b16 %v223
    %v672 = vunpack.c.l.b16 %v224
    %v673 = vunpack.c.l.b16 %v225
    %v674 = vunpack.c.l.b16 %v226
    %v675 = vunpack.c.l.b16 %v227
    %v676 = vunpack.c.l.b16 %v228
    %v677 = vunpack.c.l.b16 %v229
    %v678 = vunpack.c.l.b16 %v230
    %v679 = vunpack.c.l.b16 %v231
    %v680 = vunpack.c.l.b16 %v232
    %v681 = vunpack.c.l.b16 %v233
    %v682 = vunpack.c.l.b16 %v234
    %v683 = vunpack.c.l.b16 %v235
    %v684 = vunpack.c.l.b16 %v236
    %v685 = vunpack.c.l.b16 %v237
    %v686 = vunpack.c.l.b16 %v238
    %v687 = vunpack.c.l.b16 %v239
    %v688 = vunpack.c.l.b16 %v240
    %v689 = vunpack.c.l.b16 %v241
    %v690 = vunpack.c.l.b16 %v242
    %v691 = vunpack.c.l.b16 %v243
    %v692 = vunpack.c.l.b16 %v244
    %v693 = vunpack.c.l.b16 %v245
    %v694 = vpack.c.b16 %v631, %v630
    %v695 = vpack.c.b16 %v633, %v632
    %v696 = vpack.c.b16 %v635, %v634
    %v697 = vpack.c.b16 %v637, %v636
    %v698 = vpack.c.b16 %v639, %v638
    %v699 = vpack.c.b16 %v641, %v640
    %v700 = vpack.c.b16 %v643, %v642
    %v701 = vpack.c.b16 %v645, %v644
    %v702 = vpack.c.b16 %v647, %v646
    %v703 = vpack.c.b16 %v649, %v648
    %v704 = vpack.c.b16 %v651, %v650
    %v705 = vpack.c.b16 %v653, %v652
    %v706 = vpack.c.b16 %v655, %v654
    %v707 = vpack.c.b16 %v657, %v656
    %v708 = vpack.c.b16 %v659, %v658
    %v709 = vpack.c.b16 %v661, %v660
    %v710 = vpack.c.b16 %v663, %v662
    %v711 = vpack.c.b16 %v665, %v664
    %v712 = vpack.c.b16 %v667, %v666
    %v713 = vpack.c.b16 %v669, %v668
    %v714 = vpack.c.b16 %v671, %v670
    %v715 = vpack.c.b16 %v673, %v672
    %v716 = vpack.c.b16 %v675, %v674
    %v717 = vpack.c.b16 %v677, %v676
    %v718 = vpack.c.b16 %v679, %v678
    %v719 = vpack.c.b16 %v681, %v680
    %v720 = vpack.c.b16 %v683, %v682
    %v721 = vpack.c.b16 %v685, %v684
    %v722 = vpack.c.b16 %v687, %v686
    %v723 = vpack.c.b16 %v689, %v688
    %v724 = vpack.c.b16 %v691, %v690
    %v725 = vpack.c.b16 %v693, %v692
    %758 = vmatpush.bf16.msra.mxu0 %v701
    %759 = vmatpush.bf16.msra.mxu0 %v700
    %760 = vmatpush.bf16.msra.mxu0 %v699
    %761 = vmatpush.bf16.msra.mxu0 %v698
    %762 = vmatpush.bf16.msra.mxu0 %v697
    %763 = vmatpush.bf16.msra.mxu0 %v696
    %764 = vmatpush.bf16.msra.mxu0 %v695
    %765 = vmatpush.bf16.msra.mxu0 %v694
    %766 = vmatmul.bf16.gmra.mxu0 %v438
    %v767 = vpop.f32.mrf.mxu0
    %v768 = vadd.f32 0.0, %v767
    %v769 = vpop.f32.mrf.mxu0
    %v770 = vadd.f32 0.0, %v769
    %771 = vmatmul.bf16.gmra.mxu0 %v442
    %v772 = vpop.f32.mrf.mxu0
    %v773 = vadd.f32 0.0, %v772
    %v774 = vpop.f32.mrf.mxu0
    %v775 = vadd.f32 0.0, %v774
    %776 = vmatmul.bf16.gmra.mxu0 %v446
    %v777 = vpop.f32.mrf.mxu0
    %v778 = vadd.f32 0.0, %v777
    %v779 = vpop.f32.mrf.mxu0
    %v780 = vadd.f32 0.0, %v779
    %781 = vmatmul.bf16.gmra.mxu0 %v450
    %v782 = vpop.f32.mrf.mxu0
    %v783 = vadd.f32 0.0, %v782
    %v784 = vpop.f32.mrf.mxu0
    %v785 = vadd.f32 0.0, %v784
    %786 = vmatmul.bf16.gmra.mxu0 %v454
    %v787 = vpop.f32.mrf.mxu0
    %v788 = vadd.f32 0.0, %v787
    %v789 = vpop.f32.mrf.mxu0
    %v790 = vadd.f32 0.0, %v789
    %791 = vmatmul.bf16.gmra.mxu0 %v458
    %v792 = vpop.f32.mrf.mxu0
    %v793 = vadd.f32 0.0, %v792
    %v794 = vpop.f32.mrf.mxu0
    %v795 = vadd.f32 0.0, %v794
    %796 = vmatmul.bf16.gmra.mxu0 %v462
    %v797 = vpop.f32.mrf.mxu0
    %v798 = vadd.f32 0.0, %v797
    %v799 = vpop.f32.mrf.mxu0
    %v800 = vadd.f32 0.0, %v799
    %801 = vmatmul.bf16.gmra.mxu0 %v466
    %v802 = vpop.f32.mrf.mxu0
    %v803 = vadd.f32 0.0, %v802
    %v804 = vpop.f32.mrf.mxu0
    %v805 = vadd.f32 0.0, %v804
    %806 = vmatmul.bf16.gmra.mxu0 %v470
    %v807 = vpop.f32.mrf.mxu0
    %v808 = vadd.f32 0.0, %v807
    %v809 = vpop.f32.mrf.mxu0
    %v810 = vadd.f32 0.0, %v809
    %811 = vmatmul.bf16.gmra.mxu0 %v474
    %v812 = vpop.f32.mrf.mxu0
    %v813 = vadd.f32 0.0, %v812
    %v814 = vpop.f32.mrf.mxu0
    %v815 = vadd.f32 0.0, %v814
    %816 = vmatmul.bf16.gmra.mxu0 %v478
    %v817 = vpop.f32.mrf.mxu0
    %v818 = vadd.f32 0.0, %v817
    %v819 = vpop.f32.mrf.mxu0
    %v820 = vadd.f32 0.0, %v819
    %821 = vmatmul.bf16.gmra.mxu0 %v482
    %v822 = vpop.f32.mrf.mxu0
    %v823 = vadd.f32 0.0, %v822
    %v824 = vpop.f32.mrf.mxu0
    %v825 = vadd.f32 0.0, %v824
    %826 = vmatmul.bf16.gmra.mxu0 %v486
    %v827 = vpop.f32.mrf.mxu0
    %v828 = vadd.f32 0.0, %v827
    %v829 = vpop.f32.mrf.mxu0
    %v830 = vadd.f32 0.0, %v829
    %831 = vmatmul.bf16.gmra.mxu0 %v490
    %v832 = vpop.f32.mrf.mxu0
    %v833 = vadd.f32 0.0, %v832
    %v834 = vpop.f32.mrf.mxu0
    %v835 = vadd.f32 0.0, %v834
    %836 = vmatmul.bf16.gmra.mxu0 %v494
    %v837 = vpop.f32.mrf.mxu0
    %v838 = vadd.f32 0.0, %v837
    %v839 = vpop.f32.mrf.mxu0
    %v840 = vadd.f32 0.0, %v839
    %841 = vmatmul.bf16.gmra.mxu0 %v498
    %v842 = vpop.f32.mrf.mxu0
    %v843 = vadd.f32 0.0, %v842
    %v844 = vpop.f32.mrf.mxu0
    %v845 = vadd.f32 0.0, %v844
    %846 = vdwg.mxu0
    %847 = vmatpush.bf16.msra.mxu0 %v709
    %848 = vmatpush.bf16.msra.mxu0 %v708
    %849 = vmatpush.bf16.msra.mxu0 %v707
    %850 = vmatpush.bf16.msra.mxu0 %v706
    %851 = vmatpush.bf16.msra.mxu0 %v705
    %852 = vmatpush.bf16.msra.mxu0 %v704
    %853 = vmatpush.bf16.msra.mxu0 %v703
    %854 = vmatpush.bf16.msra.mxu0 %v702
    %855 = vmatmul.bf16.gmra.mxu0 %v439
    %v856 = vpop.f32.mrf.mxu0
    %v857 = vadd.f32 %v768, %v856
    %v858 = vpop.f32.mrf.mxu0
    %v859 = vadd.f32 %v770, %v858
    %860 = vmatmul.bf16.gmra.mxu0 %v443
    %v861 = vpop.f32.mrf.mxu0
    %v862 = vadd.f32 %v773, %v861
    %v863 = vpop.f32.mrf.mxu0
    %v864 = vadd.f32 %v775, %v863
    %865 = vmatmul.bf16.gmra.mxu0 %v447
    %v866 = vpop.f32.mrf.mxu0
    %v867 = vadd.f32 %v778, %v866
    %v868 = vpop.f32.mrf.mxu0
    %v869 = vadd.f32 %v780, %v868
    %870 = vmatmul.bf16.gmra.mxu0 %v451
    %v871 = vpop.f32.mrf.mxu0
    %v872 = vadd.f32 %v783, %v871
    %v873 = vpop.f32.mrf.mxu0
    %v874 = vadd.f32 %v785, %v873
    %875 = vmatmul.bf16.gmra.mxu0 %v455
    %v876 = vpop.f32.mrf.mxu0
    %v877 = vadd.f32 %v788, %v876
    %v878 = vpop.f32.mrf.mxu0
    %v879 = vadd.f32 %v790, %v878
    %880 = vmatmul.bf16.gmra.mxu0 %v459
    %v881 = vpop.f32.mrf.mxu0
    %v882 = vadd.f32 %v793, %v881
    %v883 = vpop.f32.mrf.mxu0
    %v884 = vadd.f32 %v795, %v883
    %885 = vmatmul.bf16.gmra.mxu0 %v463
    %v886 = vpop.f32.mrf.mxu0
    %v887 = vadd.f32 %v798, %v886
    %v888 = vpop.f32.mrf.mxu0
    %v889 = vadd.f32 %v800, %v888
    %890 = vmatmul.bf16.gmra.mxu0 %v467
    %v891 = vpop.f32.mrf.mxu0
    %v892 = vadd.f32 %v803, %v891
    %v893 = vpop.f32.mrf.mxu0
    %v894 = vadd.f32 %v805, %v893
    %895 = vmatmul.bf16.gmra.mxu0 %v471
    %v896 = vpop.f32.mrf.mxu0
    %v897 = vadd.f32 %v808, %v896
    %v898 = vpop.f32.mrf.mxu0
    %v899 = vadd.f32 %v810, %v898
    %900 = vmatmul.bf16.gmra.mxu0 %v475
    %v901 = vpop.f32.mrf.mxu0
    %v902 = vadd.f32 %v813, %v901
    %v903 = vpop.f32.mrf.mxu0
    %v904 = vadd.f32 %v815, %v903
    %905 = vmatmul.bf16.gmra.mxu0 %v479
    %v906 = vpop.f32.mrf.mxu0
    %v907 = vadd.f32 %v818, %v906
    %v908 = vpop.f32.mrf.mxu0
    %v909 = vadd.f32 %v820, %v908
    %910 = vmatmul.bf16.gmra.mxu0 %v483
    %v911 = vpop.f32.mrf.mxu0
    %v912 = vadd.f32 %v823, %v911
    %v913 = vpop.f32.mrf.mxu0
    %v914 = vadd.f32 %v825, %v913
    %915 = vmatmul.bf16.gmra.mxu0 %v487
    %v916 = vpop.f32.mrf.mxu0
    %v917 = vadd.f32 %v828, %v916
    %v918 = vpop.f32.mrf.mxu0
    %v919 = vadd.f32 %v830, %v918
    %920 = vmatmul.bf16.gmra.mxu0 %v491
    %v921 = vpop.f32.mrf.mxu0
    %v922 = vadd.f32 %v833, %v921
    %v923 = vpop.f32.mrf.mxu0
    %v924 = vadd.f32 %v835, %v923
    %925 = vmatmul.bf16.gmra.mxu0 %v495
    %v926 = vpop.f32.mrf.mxu0
    %v927 = vadd.f32 %v838, %v926
    %v928 = vpop.f32.mrf.mxu0
    %v929 = vadd.f32 %v840, %v928
    %930 = vmatmul.bf16.gmra.mxu0 %v499
    %v931 = vpop.f32.mrf.mxu0
    %v932 = vadd.f32 %v843, %v931
    %v933 = vpop.f32.mrf.mxu0
    %v934 = vadd.f32 %v845, %v933
    %935 = vdwg.mxu0
    %936 = vmatpush.bf16.msra.mxu0 %v717
    %937 = vmatpush.bf16.msra.mxu0 %v716
    %938 = vmatpush.bf16.msra.mxu0 %v715
    %939 = vmatpush.bf16.msra.mxu0 %v714
    %940 = vmatpush.bf16.msra.mxu0 %v713
    %941 = vmatpush.bf16.msra.mxu0 %v712
    %942 = vmatpush.bf16.msra.mxu0 %v711
    %943 = vmatpush.bf16.msra.mxu0 %v710
    %944 = vmatmul.bf16.gmra.mxu0 %v440
    %v945 = vpop.f32.mrf.mxu0
    %v946 = vadd.f32 %v857, %v945
    %v947 = vpop.f32.mrf.mxu0
    %v948 = vadd.f32 %v859, %v947
    %949 = vmatmul.bf16.gmra.mxu0 %v444
    %v950 = vpop.f32.mrf.mxu0
    %v951 = vadd.f32 %v862, %v950
    %v952 = vpop.f32.mrf.mxu0
    %v953 = vadd.f32 %v864, %v952
    %954 = vmatmul.bf16.gmra.mxu0 %v448
    %v955 = vpop.f32.mrf.mxu0
    %v956 = vadd.f32 %v867, %v955
    %v957 = vpop.f32.mrf.mxu0
    %v958 = vadd.f32 %v869, %v957
    %959 = vmatmul.bf16.gmra.mxu0 %v452
    %v960 = vpop.f32.mrf.mxu0
    %v961 = vadd.f32 %v872, %v960
    %v962 = vpop.f32.mrf.mxu0
    %v963 = vadd.f32 %v874, %v962
    %964 = vmatmul.bf16.gmra.mxu0 %v456
    %v965 = vpop.f32.mrf.mxu0
    %v966 = vadd.f32 %v877, %v965
    %v967 = vpop.f32.mrf.mxu0
    %v968 = vadd.f32 %v879, %v967
    %969 = vmatmul.bf16.gmra.mxu0 %v460
    %v970 = vpop.f32.mrf.mxu0
    %v971 = vadd.f32 %v882, %v970
    %v972 = vpop.f32.mrf.mxu0
    %v973 = vadd.f32 %v884, %v972
    %974 = vmatmul.bf16.gmra.mxu0 %v464
    %v975 = vpop.f32.mrf.mxu0
    %v976 = vadd.f32 %v887, %v975
    %v977 = vpop.f32.mrf.mxu0
    %v978 = vadd.f32 %v889, %v977
    %979 = vmatmul.bf16.gmra.mxu0 %v468
    %v980 = vpop.f32.mrf.mxu0
    %v981 = vadd.f32 %v892, %v980
    %v982 = vpop.f32.mrf.mxu0
    %v983 = vadd.f32 %v894, %v982
    %984 = vmatmul.bf16.gmra.mxu0 %v472
    %v985 = vpop.f32.mrf.mxu0
    %v986 = vadd.f32 %v897, %v985
    %v987 = vpop.f32.mrf.mxu0
    %v988 = vadd.f32 %v899, %v987
    %989 = vmatmul.bf16.gmra.mxu0 %v476
    %v990 = vpop.f32.mrf.mxu0
    %v991 = vadd.f32 %v902, %v990
    %v992 = vpop.f32.mrf.mxu0
    %v993 = vadd.f32 %v904, %v992
    %994 = vmatmul.bf16.gmra.mxu0 %v480
    %v995 = vpop.f32.mrf.mxu0
    %v996 = vadd.f32 %v907, %v995
    %v997 = vpop.f32.mrf.mxu0
    %v998 = vadd.f32 %v909, %v997
    %999 = vmatmul.bf16.gmra.mxu0 %v484
    %v1000 = vpop.f32.mrf.mxu0
    %v1001 = vadd.f32 %v912, %v1000
    %v1002 = vpop.f32.mrf.mxu0
    %v1003 = vadd.f32 %v914, %v1002
    %1004 = vmatmul.bf16.gmra.mxu0 %v488
    %v1005 = vpop.f32.mrf.mxu0
    %v1006 = vadd.f32 %v917, %v1005
    %v1007 = vpop.f32.mrf.mxu0
    %v1008 = vadd.f32 %v919, %v1007
    %1009 = vmatmul.bf16.gmra.mxu0 %v492
    %v1010 = vpop.f32.mrf.mxu0
    %v1011 = vadd.f32 %v922, %v1010
    %v1012 = vpop.f32.mrf.mxu0
    %v1013 = vadd.f32 %v924, %v1012
    %1014 = vmatmul.bf16.gmra.mxu0 %v496
    %v1015 = vpop.f32.mrf.mxu0
    %v1016 = vadd.f32 %v927, %v1015
    %v1017 = vpop.f32.mrf.mxu0
    %v1018 = vadd.f32 %v929, %v1017
    %1019 = vmatmul.bf16.gmra.mxu0 %v500
    %v1020 = vpop.f32.mrf.mxu0
    %v1021 = vadd.f32 %v932, %v1020
    %v1022 = vpop.f32.mrf.mxu0
    %v1023 = vadd.f32 %v934, %v1022
    %1024 = vdwg.mxu0
    %1025 = vmatpush.bf16.msra.mxu0 %v725
    %1026 = vmatpush.bf16.msra.mxu0 %v724
    %1027 = vmatpush.bf16.msra.mxu0 %v723
    %1028 = vmatpush.bf16.msra.mxu0 %v722
    %1029 = vmatpush.bf16.msra.mxu0 %v721
    %1030 = vmatpush.bf16.msra.mxu0 %v720
    %1031 = vmatpush.bf16.msra.mxu0 %v719
    %1032 = vmatpush.bf16.msra.mxu0 %v718
    %1033 = vmatmul.bf16.gmra.mxu0 %v441
    %v1034 = vpop.f32.mrf.mxu0
    %v1035 = vadd.f32 %v946, %v1034
    %v1036 = vpop.f32.mrf.mxu0
    %v1037 = vadd.f32 %v948, %v1036
    %1038 = vmatmul.bf16.gmra.mxu0 %v445
    %v1039 = vpop.f32.mrf.mxu0
    %v1040 = vadd.f32 %v951, %v1039
    %v1041 = vpop.f32.mrf.mxu0
    %v1042 = vadd.f32 %v953, %v1041
    %1043 = vmatmul.bf16.gmra.mxu0 %v449
    %v1044 = vpop.f32.mrf.mxu0
    %v1045 = vadd.f32 %v956, %v1044
    %v1046 = vpop.f32.mrf.mxu0
    %v1047 = vadd.f32 %v958, %v1046
    %1048 = vmatmul.bf16.gmra.mxu0 %v453
    %v1049 = vpop.f32.mrf.mxu0
    %v1050 = vadd.f32 %v961, %v1049
    %v1051 = vpop.f32.mrf.mxu0
    %v1052 = vadd.f32 %v963, %v1051
    %1053 = vmatmul.bf16.gmra.mxu0 %v457
    %v1054 = vpop.f32.mrf.mxu0
    %v1055 = vadd.f32 %v966, %v1054
    %v1056 = vpop.f32.mrf.mxu0
    %v1057 = vadd.f32 %v968, %v1056
    %1058 = vmatmul.bf16.gmra.mxu0 %v461
    %v1059 = vpop.f32.mrf.mxu0
    %v1060 = vadd.f32 %v971, %v1059
    %v1061 = vpop.f32.mrf.mxu0
    %v1062 = vadd.f32 %v973, %v1061
    %1063 = vmatmul.bf16.gmra.mxu0 %v465
    %v1064 = vpop.f32.mrf.mxu0
    %v1065 = vadd.f32 %v976, %v1064
    %v1066 = vpop.f32.mrf.mxu0
    %v1067 = vadd.f32 %v978, %v1066
    %1068 = vmatmul.bf16.gmra.mxu0 %v469
    %v1069 = vpop.f32.mrf.mxu0
    %v1070 = vadd.f32 %v981, %v1069
    %v1071 = vpop.f32.mrf.mxu0
    %v1072 = vadd.f32 %v983, %v1071
    %1073 = vmatmul.bf16.gmra.mxu0 %v473
    %v1074 = vpop.f32.mrf.mxu0
    %v1075 = vadd.f32 %v986, %v1074
    %v1076 = vpop.f32.mrf.mxu0
    %v1077 = vadd.f32 %v988, %v1076
    %1078 = vmatmul.bf16.gmra.mxu0 %v477
    %v1079 = vpop.f32.mrf.mxu0
    %v1080 = vadd.f32 %v991, %v1079
    %v1081 = vpop.f32.mrf.mxu0
    %v1082 = vadd.f32 %v993, %v1081
    %1083 = vmatmul.bf16.gmra.mxu0 %v481
    %v1084 = vpop.f32.mrf.mxu0
    %v1085 = vadd.f32 %v996, %v1084
    %v1086 = vpop.f32.mrf.mxu0
    %v1087 = vadd.f32 %v998, %v1086
    %1088 = vmatmul.bf16.gmra.mxu0 %v485
    %v1089 = vpop.f32.mrf.mxu0
    %v1090 = vadd.f32 %v1001, %v1089
    %v1091 = vpop.f32.mrf.mxu0
    %v1092 = vadd.f32 %v1003, %v1091
    %1093 = vmatmul.bf16.gmra.mxu0 %v489
    %v1094 = vpop.f32.mrf.mxu0
    %v1095 = vadd.f32 %v1006, %v1094
    %v1096 = vpop.f32.mrf.mxu0
    %v1097 = vadd.f32 %v1008, %v1096
    %1098 = vmatmul.bf16.gmra.mxu0 %v493
    %v1099 = vpop.f32.mrf.mxu0
    %v1100 = vadd.f32 %v1011, %v1099
    %v1101 = vpop.f32.mrf.mxu0
    %v1102 = vadd.f32 %v1013, %v1101
    %1103 = vmatmul.bf16.gmra.mxu0 %v497
    %v1104 = vpop.f32.mrf.mxu0
    %v1105 = vadd.f32 %v1016, %v1104
    %v1106 = vpop.f32.mrf.mxu0
    %v1107 = vadd.f32 %v1018, %v1106
    %1108 = vmatmul.bf16.gmra.mxu0 %v501
    %v1109 = vpop.f32.mrf.mxu0
    %v1110 = vadd.f32 %v1021, %v1109
    %v1111 = vpop.f32.mrf.mxu0
    %v1112 = vadd.f32 %v1023, %v1111
    %1113 = vdwg.mxu0
    %v1114 = vadd.f32 %v86, %v1035
    %v1115 = vadd.f32 %v87, %v1037
    %v1116 = vadd.f32 %v88, %v1040
    %v1117 = vadd.f32 %v89, %v1042
    %v1118 = vadd.f32 %v90, %v1045
    %v1119 = vadd.f32 %v91, %v1047
    %v1120 = vadd.f32 %v92, %v1050
    %v1121 = vadd.f32 %v93, %v1052
    %v1122 = vadd.f32 %v94, %v1055
    %v1123 = vadd.f32 %v95, %v1057
    %v1124 = vadd.f32 %v96, %v1060
    %v1125 = vadd.f32 %v97, %v1062
    %v1126 = vadd.f32 %v98, %v1065
    %v1127 = vadd.f32 %v99, %v1067
    %v1128 = vadd.f32 %v100, %v1070
    %v1129 = vadd.f32 %v101, %v1072
    %v1130 = vadd.f32 %v102, %v1075
    %v1131 = vadd.f32 %v103, %v1077
    %v1132 = vadd.f32 %v104, %v1080
    %v1133 = vadd.f32 %v105, %v1082
    %v1134 = vadd.f32 %v106, %v1085
    %v1135 = vadd.f32 %v107, %v1087
    %v1136 = vadd.f32 %v108, %v1090
    %v1137 = vadd.f32 %v109, %v1092
    %v1138 = vadd.f32 %v110, %v1095
    %v1139 = vadd.f32 %v111, %v1097
    %v1140 = vadd.f32 %v112, %v1100
    %v1141 = vadd.f32 %v113, %v1102
    %v1142 = vadd.f32 %v114, %v1105
    %v1143 = vadd.f32 %v115, %v1107
    %v1144 = vadd.f32 %v116, %v1110
    %v1145 = vadd.f32 %v117, %v1112
    %1146 = vst [vmem:[#allocation2] sm:$0xff] %v1114
    %1147 = vst [vmem:[#allocation2 + $0x8] sm:$0xff] %v1115
    %1148 = vst [vmem:[#allocation2 + $0x10] sm:$0xff] %v1116
    %1149 = vst [vmem:[#allocation2 + $0x18] sm:$0xff] %v1117
    %1150 = vst [vmem:[#allocation2 + $0x20] sm:$0xff] %v1118
    %1151 = vst [vmem:[#allocation2 + $0x28] sm:$0xff] %v1119
    %1152 = vst [vmem:[#allocation2 + $0x30] sm:$0xff] %v1120
    %1153 = vst [vmem:[#allocation2 + $0x38] sm:$0xff] %v1121
    %1154 = vst [vmem:[#allocation2 + $0x40] sm:$0xff] %v1122
    %1155 = vst [vmem:[#allocation2 + $0x48] sm:$0xff] %v1123
    %1156 = vst [vmem:[#allocation2 + $0x50] sm:$0xff] %v1124
    %1157 = vst [vmem:[#allocation2 + $0x58] sm:$0xff] %v1125
    %1158 = vst [vmem:[#allocation2 + $0x60] sm:$0xff] %v1126
    %1159 = vst [vmem:[#allocation2 + $0x68] sm:$0xff] %v1127
    %1160 = vst [vmem:[#allocation2 + $0x70] sm:$0xff] %v1128
    %1161 = vst [vmem:[#allocation2 + $0x78] sm:$0xff] %v1129
    %1162 = vst [vmem:[#allocation2 + $0x80] sm:$0xff] %v1130
    %1163 = vst [vmem:[#allocation2 + $0x88] sm:$0xff] %v1131
    %1164 = vst [vmem:[#allocation2 + $0x90] sm:$0xff] %v1132
    %1165 = vst [vmem:[#allocation2 + $0x98] sm:$0xff] %v1133
    %1166 = vst [vmem:[#allocation2 + $0xa0] sm:$0xff] %v1134
    %1167 = vst [vmem:[#allocation2 + $0xa8] sm:$0xff] %v1135
    %1168 = vst [vmem:[#allocation2 + $0xb0] sm:$0xff] %v1136
    %1169 = vst [vmem:[#allocation2 + $0xb8] sm:$0xff] %v1137
    %1170 = vst [vmem:[#allocation2 + $0xc0] sm:$0xff] %v1138
    %1171 = vst [vmem:[#allocation2 + $0xc8] sm:$0xff] %v1139
    %1172 = vst [vmem:[#allocation2 + $0xd0] sm:$0xff] %v1140
    %1173 = vst [vmem:[#allocation2 + $0xd8] sm:$0xff] %v1141
    %1174 = vst [vmem:[#allocation2 + $0xe0] sm:$0xff] %v1142
    %1175 = vst [vmem:[#allocation2 + $0xe8] sm:$0xff] %v1143
    %1176 = vst [vmem:[#allocation2 + $0xf0] sm:$0xff] %v1144
    %1177 = vst [vmem:[#allocation2 + $0xf8] sm:$0xff] %v1145
    // Predicated region
    $region30: #{tpu_custom_call.1} parent=1 // pred_check
      %p1178 = pneg %p50
    $region31: #{tpu_custom_call.1} parent=1 // pred_check_branch
      %1180 = sbr.rel (%p1178) target = $region33
    $region32: #{tpu_custom_call.1} parent=1 // pred_region
      %v1181 = vld [vmem:[#allocation2] sm:$0xff]
      %v1182 = vld [vmem:[#allocation2 + $0x8] sm:$0xff]
      %v1183 = vld [vmem:[#allocation2 + $0x10] sm:$0xff]
      %v1184 = vld [vmem:[#allocation2 + $0x18] sm:$0xff]
      %v1185 = vld [vmem:[#allocation2 + $0x20] sm:$0xff]
      %v1186 = vld [vmem:[#allocation2 + $0x28] sm:$0xff]
      %v1187 = vld [vmem:[#allocation2 + $0x30] sm:$0xff]
      %v1188 = vld [vmem:[#allocation2 + $0x38] sm:$0xff]
      %v1189 = vld [vmem:[#allocation2 + $0x40] sm:$0xff]
      %v1190 = vld [vmem:[#allocation2 + $0x48] sm:$0xff]
      %v1191 = vld [vmem:[#allocation2 + $0x50] sm:$0xff]
      %v1192 = vld [vmem:[#allocation2 + $0x58] sm:$0xff]
      %v1193 = vld [vmem:[#allocation2 + $0x60] sm:$0xff]
      %v1194 = vld [vmem:[#allocation2 + $0x68] sm:$0xff]
      %v1195 = vld [vmem:[#allocation2 + $0x70] sm:$0xff]
      %v1196 = vld [vmem:[#allocation2 + $0x78] sm:$0xff]
      %v1197 = vld [vmem:[#allocation2 + $0x80] sm:$0xff]
      %v1198 = vld [vmem:[#allocation2 + $0x88] sm:$0xff]
      %v1199 = vld [vmem:[#allocation2 + $0x90] sm:$0xff]
      %v1200 = vld [vmem:[#allocation2 + $0x98] sm:$0xff]
      %v1201 = vld [vmem:[#allocation2 + $0xa0] sm:$0xff]
      %v1202 = vld [vmem:[#allocation2 + $0xa8] sm:$0xff]
      %v1203 = vld [vmem:[#allocation2 + $0xb0] sm:$0xff]
      %v1204 = vld [vmem:[#allocation2 + $0xb8] sm:$0xff]
      %v1205 = vld [vmem:[#allocation2 + $0xc0] sm:$0xff]
      %v1206 = vld [vmem:[#allocation2 + $0xc8] sm:$0xff]
      %v1207 = vld [vmem:[#allocation2 + $0xd0] sm:$0xff]
      %v1208 = vld [vmem:[#allocation2 + $0xd8] sm:$0xff]
      %v1209 = vld [vmem:[#allocation2 + $0xe0] sm:$0xff]
      %v1210 = vld [vmem:[#allocation2 + $0xe8] sm:$0xff]
      %v1211 = vld [vmem:[#allocation2 + $0xf0] sm:$0xff]
      %v1212 = vld [vmem:[#allocation2 + $0xf8] sm:$0xff]
      %v1213 = vld [vmem:[%s2] sm:$0x1]
      %v1215 = vperm.slane %v1213, 0
      %v1217 = vmul.f32 %v1181, %v1215
      %v1218 = vmul.f32 %v1182, %v1215
      %v1219 = vmul.f32 %v1183, %v1215
      %v1220 = vmul.f32 %v1184, %v1215
      %v1221 = vmul.f32 %v1185, %v1215
      %v1222 = vmul.f32 %v1186, %v1215
      %v1223 = vmul.f32 %v1187, %v1215
      %v1224 = vmul.f32 %v1188, %v1215
      %v1225 = vmul.f32 %v1189, %v1215
      %v1226 = vmul.f32 %v1190, %v1215
      %v1227 = vmul.f32 %v1191, %v1215
      %v1228 = vmul.f32 %v1192, %v1215
      %v1229 = vmul.f32 %v1193, %v1215
      %v1230 = vmul.f32 %v1194, %v1215
      %v1231 = vmul.f32 %v1195, %v1215
      %v1232 = vmul.f32 %v1196, %v1215
      %v1233 = vmul.f32 %v1197, %v1215
      %v1234 = vmul.f32 %v1198, %v1215
      %v1235 = vmul.f32 %v1199, %v1215
      %v1236 = vmul.f32 %v1200, %v1215
      %v1237 = vmul.f32 %v1201, %v1215
      %v1238 = vmul.f32 %v1202, %v1215
      %v1239 = vmul.f32 %v1203, %v1215
      %v1240 = vmul.f32 %v1204, %v1215
      %v1241 = vmul.f32 %v1205, %v1215
      %v1242 = vmul.f32 %v1206, %v1215
      %v1243 = vmul.f32 %v1207, %v1215
      %v1244 = vmul.f32 %v1208, %v1215
      %v1245 = vmul.f32 %v1209, %v1215
      %v1246 = vmul.f32 %v1210, %v1215
      %v1247 = vmul.f32 %v1211, %v1215
      %v1248 = vmul.f32 %v1212, %v1215
      %v1249 = vld [vmem:[%s3] sm:$0x1]
      %v1251 = vperm.slane %v1249, 0
      %v1253 = vadd.f32 %v1217, %v1251
      %v1254 = vadd.f32 %v1218, %v1251
      %v1255 = vadd.f32 %v1219, %v1251
      %v1256 = vadd.f32 %v1220, %v1251
      %v1257 = vadd.f32 %v1221, %v1251
      %v1258 = vadd.f32 %v1222, %v1251
      %v1259 = vadd.f32 %v1223, %v1251
      %v1260 = vadd.f32 %v1224, %v1251
      %v1261 = vadd.f32 %v1225, %v1251
      %v1262 = vadd.f32 %v1226, %v1251
      %v1263 = vadd.f32 %v1227, %v1251
      %v1264 = vadd.f32 %v1228, %v1251
      %v1265 = vadd.f32 %v1229, %v1251
      %v1266 = vadd.f32 %v1230, %v1251
      %v1267 = vadd.f32 %v1231, %v1251
      %v1268 = vadd.f32 %v1232, %v1251
      %v1269 = vadd.f32 %v1233, %v1251
      %v1270 = vadd.f32 %v1234, %v1251
      %v1271 = vadd.f32 %v1235, %v1251
      %v1272 = vadd.f32 %v1236, %v1251
      %v1273 = vadd.f32 %v1237, %v1251
      %v1274 = vadd.f32 %v1238, %v1251
      %v1275 = vadd.f32 %v1239, %v1251
      %v1276 = vadd.f32 %v1240, %v1251
      %v1277 = vadd.f32 %v1241, %v1251
      %v1278 = vadd.f32 %v1242, %v1251
      %v1279 = vadd.f32 %v1243, %v1251
      %v1280 = vadd.f32 %v1244, %v1251
      %v1281 = vadd.f32 %v1245, %v1251
      %v1282 = vadd.f32 %v1246, %v1251
      %v1283 = vadd.f32 %v1247, %v1251
      %v1284 = vadd.f32 %v1248, %v1251
      %v1285 = vmax.f32 %v1253, 0.0
      %v1286 = vmax.f32 %v1254, 0.0
      %v1287 = vmax.f32 %v1255, 0.0
      %v1288 = vmax.f32 %v1256, 0.0
      %v1289 = vmax.f32 %v1257, 0.0
      %v1290 = vmax.f32 %v1258, 0.0
      %v1291 = vmax.f32 %v1259, 0.0
      %v1292 = vmax.f32 %v1260, 0.0
      %v1293 = vmax.f32 %v1261, 0.0
      %v1294 = vmax.f32 %v1262, 0.0
      %v1295 = vmax.f32 %v1263, 0.0
      %v1296 = vmax.f32 %v1264, 0.0
      %v1297 = vmax.f32 %v1265, 0.0
      %v1298 = vmax.f32 %v1266, 0.0
      %v1299 = vmax.f32 %v1267, 0.0
      %v1300 = vmax.f32 %v1268, 0.0
      %v1301 = vmax.f32 %v1269, 0.0
      %v1302 = vmax.f32 %v1270, 0.0
      %v1303 = vmax.f32 %v1271, 0.0
      %v1304 = vmax.f32 %v1272, 0.0
      %v1305 = vmax.f32 %v1273, 0.0
      %v1306 = vmax.f32 %v1274, 0.0
      %v1307 = vmax.f32 %v1275, 0.0
      %v1308 = vmax.f32 %v1276, 0.0
      %v1309 = vmax.f32 %v1277, 0.0
      %v1310 = vmax.f32 %v1278, 0.0
      %v1311 = vmax.f32 %v1279, 0.0
      %v1312 = vmax.f32 %v1280, 0.0
      %v1313 = vmax.f32 %v1281, 0.0
      %v1314 = vmax.f32 %v1282, 0.0
      %v1315 = vmax.f32 %v1283, 0.0
      %v1316 = vmax.f32 %v1284, 0.0
      %1317 = vst [vmem:[#allocation8] sm:$0xff] %v1285
      %1318 = vst [vmem:[#allocation8 + $0x8] sm:$0xff] %v1286
      %1319 = vst [vmem:[#allocation8 + $0x10] sm:$0xff] %v1287
      %1320 = vst [vmem:[#allocation8 + $0x18] sm:$0xff] %v1288
      %1321 = vst [vmem:[#allocation8 + $0x20] sm:$0xff] %v1289
      %1322 = vst [vmem:[#allocation8 + $0x28] sm:$0xff] %v1290
      %1323 = vst [vmem:[#allocation8 + $0x30] sm:$0xff] %v1291
      %1324 = vst [vmem:[#allocation8 + $0x38] sm:$0xff] %v1292
      %1325 = vst [vmem:[#allocation8 + $0x40] sm:$0xff] %v1293
      %1326 = vst [vmem:[#allocation8 + $0x48] sm:$0xff] %v1294
      %1327 = vst [vmem:[#allocation8 + $0x50] sm:$0xff] %v1295
      %1328 = vst [vmem:[#allocation8 + $0x58] sm:$0xff] %v1296
      %1329 = vst [vmem:[#allocation8 + $0x60] sm:$0xff] %v1297
      %1330 = vst [vmem:[#allocation8 + $0x68] sm:$0xff] %v1298
      %1331 = vst [vmem:[#allocation8 + $0x70] sm:$0xff] %v1299
      %1332 = vst [vmem:[#allocation8 + $0x78] sm:$0xff] %v1300
      %1333 = vst [vmem:[#allocation8 + $0x80] sm:$0xff] %v1301
      %1334 = vst [vmem:[#allocation8 + $0x88] sm:$0xff] %v1302
      %1335 = vst [vmem:[#allocation8 + $0x90] sm:$0xff] %v1303
      %1336 = vst [vmem:[#allocation8 + $0x98] sm:$0xff] %v1304
      %1337 = vst [vmem:[#allocation8 + $0xa0] sm:$0xff] %v1305
      %1338 = vst [vmem:[#allocation8 + $0xa8] sm:$0xff] %v1306
      %1339 = vst [vmem:[#allocation8 + $0xb0] sm:$0xff] %v1307
      %1340 = vst [vmem:[#allocation8 + $0xb8] sm:$0xff] %v1308
      %1341 = vst [vmem:[#allocation8 + $0xc0] sm:$0xff] %v1309
      %1342 = vst [vmem:[#allocation8 + $0xc8] sm:$0xff] %v1310
      %1343 = vst [vmem:[#allocation8 + $0xd0] sm:$0xff] %v1311
      %1344 = vst [vmem:[#allocation8 + $0xd8] sm:$0xff] %v1312
      %1345 = vst [vmem:[#allocation8 + $0xe0] sm:$0xff] %v1313
      %1346 = vst [vmem:[#allocation8 + $0xe8] sm:$0xff] %v1314
      %1347 = vst [vmem:[#allocation8 + $0xf0] sm:$0xff] %v1315
      %1348 = vst [vmem:[#allocation8 + $0xf8] sm:$0xff] %v1316
    $region33: #{tpu_custom_call.1} parent=1 // pred_fallthru
      _
    // Predicated region
    $region34: #{tpu_custom_call.1} parent=1 // pred_check
      _
    $region35: #{tpu_custom_call.1} parent=1 // pred_check_branch
      %1350 = sbr.rel (0) target = $region37
    $region36: #{tpu_custom_call.1} parent=1 // pred_region
      %1352 = vsyncadd [#allocation5], 0
      %s1353 = sshll.u32 [#allocation8], 4
      %s1354 = int_to_ptr.vmem [resolvable:$true] %s1353
      %s1355 = sshll.u32 %s4, 4
      %s1356 = int_to_ptr.hbm [resolvable:$true] %s1355
      %1361 = dma.vmem_to_hbm [thread:$0]  %s1354, 4096, %s1356, [#allocation5], 128, 128, 8
    $region37: #{tpu_custom_call.1} parent=1 // pred_fallthru
      _
    // Predicated region
    $region38: #{tpu_custom_call.1} parent=1 // pred_check
      _
    $region39: #{tpu_custom_call.1} parent=1 // pred_check_branch
      %1363 = sbr.rel (0) target = $region41
    $region40: #{tpu_custom_call.1} parent=1 // pred_region
      %1365 = dma.done [#allocation5], 4096
    $region41: #{tpu_custom_call.1} parent=1 // pred_fallthru
      _
    %1366 = vsyncpa [#allocation4], 1
    %1367 = vsyncpa [#allocation7], 1
    %1368 = vsyncpa [#allocation5], 1

</llo_original>
